<compile_context>
chip_gen: v6e
topology: v6e:2x2x1
jax: 0.10.0
libtpu: 0.0.40
codegen_flags: <defaults>
</compile_context>

<pallas_src>
import functools

import jax
import jax.numpy as jnp
from jax.experimental import pallas as pl
from jax.experimental.pallas import tpu as pltpu

IN_F = 784       # 28 * 28 (nn.Flatten)
IN_PAD = 896     # 7 * 128 lane-dense K for fc1
H1 = 128
H2 = 64
OUT = 10
LANE = 128


def _mlp_kernel(x_ref, w1_ref, b1_ref, w2_ref, b2_ref, w3_ref, b3_ref,
                x3_ref, x1_ref, x2_ref):
    """Fused 3-layer MLP forward on one (TB, 896) batch tile.

    bf16 matmul inputs, f32 accumulation / bias / ReLU, lane-dense f32 stores.
    Padded columns of w2/b2 and padded rows/cols of w3/b3 are zero, so the
    padded output lanes are exactly zero and are sliced off in the wrapper.
    """
    x = x_ref[...]                                                  # (TB, 896) bf16

    h1 = jnp.dot(x, w1_ref[...], preferred_element_type=jnp.float32) + b1_ref[...]
    x1 = jnp.maximum(h1, 0.0)                                       # (TB, 128) f32

    h2 = jnp.dot(x1.astype(w2_ref.dtype), w2_ref[...],
                 preferred_element_type=jnp.float32) + b2_ref[...]
    x2 = jnp.maximum(h2, 0.0)                                       # (TB, 128) f32, cols 64.. == 0

    h3 = jnp.dot(x2.astype(w3_ref.dtype), w3_ref[...],
                 preferred_element_type=jnp.float32) + b3_ref[...]  # (TB, 128) f32, cols 10.. == 0

    x1_ref[...] = x1.astype(x1_ref.dtype)
    x2_ref[...] = x2.astype(x2_ref.dtype)
    x3_ref[...] = h3.astype(x3_ref.dtype)


def _pack_params(params):
    """Cast weights to bf16 and zero-pad to lane-dense shapes."""
    w1, b1, w2, b2, w3, b3 = params
    w1p = jnp.zeros((IN_PAD, H1), jnp.bfloat16).at[:IN_F, :].set(w1.astype(jnp.bfloat16))
    w2p = jnp.zeros((H1, LANE), jnp.bfloat16).at[:, :H2].set(w2.astype(jnp.bfloat16))
    w3p = jnp.zeros((LANE, LANE), jnp.bfloat16).at[:H2, :OUT].set(w3.astype(jnp.bfloat16))
    b1p = b1.reshape(1, H1).astype(jnp.float32)
    b2p = jnp.zeros((1, LANE), jnp.float32).at[:, :H2].set(b2.reshape(1, H2).astype(jnp.float32))
    b3p = jnp.zeros((1, LANE), jnp.float32).at[:, :OUT].set(b3.reshape(1, OUT).astype(jnp.float32))
    return w1p, b1p, w2p, b2p, w3p, b3p


def _choose_tb(batch):
    """Batch tile: multiples of 256 keep the v6e/v7x MXU full (128 for v5e);
    small batches use one rounded-up tile.  Per-step VMEM stays << default limit."""
    for tb in (1024, 512, 256, 128):
        if batch >= tb:
            return tb
    return max(8, -(-batch // 8) * 8)


@jax.jit
def simple_nn_forward(x_img, params):
    """x_img: (B, 1, 28, 28) float32 NCHW.  Returns (x3, x1, x2) like SimpleNN.forward."""
    w1p, b1p, w2p, b2p, w3p, b3p = _pack_params(params)

    B = x_img.shape[0]
    x = x_img.reshape(B, -1)                     # nn.Flatten()

    TB = _choose_tb(B)                           # static (depends only on shape)
    Bp = -(-B // TB) * TB                        # batch padded to a TB multiple

    x_pad = jnp.zeros((Bp, IN_PAD), jnp.bfloat16)
    x_pad = x_pad.at[:B, :IN_F].set(x.astype(jnp.bfloat16))

    row_spec = lambda i: (i, 0)                  # batch-tiled arrays
    const_spec = lambda i: (0, 0)                # VMEM-resident weights/biases

    x3p, x1, x2p = pl.pallas_call(
        _mlp_kernel,
        out_shape=(
            jax.ShapeDtypeStruct((Bp, LANE), jnp.float32),   # padded logits
            jax.ShapeDtypeStruct((Bp, H1), jnp.float32),     # relu(fc1)
            jax.ShapeDtypeStruct((Bp, LANE), jnp.float32),   # padded relu(fc2)
        ),
        grid=(Bp // TB,),
        in_specs=[
            pl.BlockSpec((TB, IN_PAD), row_spec),
            pl.BlockSpec((IN_PAD, H1), const_spec),
            pl.BlockSpec((1, H1), const_spec),
            pl.BlockSpec((H1, LANE), const_spec),
            pl.BlockSpec((1, LANE), const_spec),
            pl.BlockSpec((LANE, LANE), const_spec),
            pl.BlockSpec((1, LANE), const_spec),
        ],
        out_specs=(
            pl.BlockSpec((TB, LANE), row_spec),
            pl.BlockSpec((TB, H1), row_spec),
            pl.BlockSpec((TB, LANE), row_spec),
        ),
        compiler_params=pltpu.CompilerParams(
            dimension_semantics=("parallel",)),
    )(x_pad, w1p, b1p, w2p, b2p, w3p, b3p)

    return x3p[:B, :OUT], x1[:B], x2p[:B, :H2]


def init_params(key):
    """Deterministic synthetic parameters matching nn.Linear shapes.
    Weights are (in, out); biases kept 2D (1, out)."""
    k1, k2, k3, k4, k5, k6 = jax.random.split(key, 6)
    w1 = jax.random.normal(k1, (784, 128), jnp.float32) * (1.0 / 784 ** 0.5)
    b1 = jax.random.normal(k2, (1, 128), jnp.float32) * 0.01
    w2 = jax.random.normal(k3, (128, 64), jnp.float32) * (1.0 / 128 ** 0.5)
    b2 = jax.random.normal(k4, (1, 64), jnp.float32) * 0.01
    w3 = jax.random.normal(k5, (64, 10), jnp.float32) * (1.0 / 64 ** 0.5)
    b3 = jax.random.normal(k6, (1, 10), jnp.float32) * 0.01
    return (w1, b1, w2, b2, w3, b3)


def reference_forward(x_img, params):
    """Pure-JAX f32 reference mirroring the PyTorch forward."""
    w1, b1, w2, b2, w3, b3 = params
    x = x_img.reshape(x_img.shape[0], -1)
    x1 = jnp.maximum(x @ w1 + b1, 0.0)
    x2 = jnp.maximum(x1 @ w2 + b2, 0.0)
    x3 = x2 @ w3 + b3
    return x3, x1, x2


def reference_forward_bf16(x_img, params):
    """Reference with the same bf16-input / f32-accumulate numerics as the kernel."""
    w1, b1, w2, b2, w3, b3 = params
    bf = jnp.bfloat16
    x = x_img.reshape(x_img.shape[0], -1).astype(bf)
    h1 = jnp.dot(x, w1.astype(bf), preferred_element_type=jnp.float32) + b1
    x1 = jnp.maximum(h1, 0.0)
    h2 = jnp.dot(x1.astype(bf), w2.astype(bf), preferred_element_type=jnp.float32) + b2
    x2 = jnp.maximum(h2, 0.0)
    x3 = jnp.dot(x2.astype(bf), w3.astype(bf), preferred_element_type=jnp.float32) + b3
    return x3, x1, x2


if __name__ == "__main__":
    key = jax.random.PRNGKey(0)
    k_x, k_p = jax.random.split(key)

    B = 8
    x_img = jax.random.normal(k_x, (B, 1, 28, 28), jnp.float32)  # NCHW, 1*28*28 = 784
    params = init_params(k_p)

    x3, x1, x2 = simple_nn_forward(x_img, params)
    jax.block_until_ready((x3, x1, x2))

    assert x3.shape == (B, 10) and x1.shape == (B, 128) and x2.shape == (B, 64)

    # Tight check vs. a reference using the same bf16-input/f32-accum numerics.
    m3, m1, m2 = reference_forward_bf16(x_img, params)
    assert jnp.allclose(x3, m3, atol=1e-3, rtol=1e-3)
    assert jnp.allclose(x1, m1, atol=1e-3, rtol=1e-3)
    assert jnp.allclose(x2, m2, atol=1e-3, rtol=1e-3)

    # Loose check vs. the pure-f32 module semantics (bf16 matmul inputs).
    r3, r1, r2 = reference_forward(x_img, params)
    assert jnp.allclose(x3, r3, atol=5e-2, rtol=5e-2)
    assert jnp.allclose(x1, r1, atol=5e-2, rtol=5e-2)
    assert jnp.allclose(x2, r2, atol=5e-2, rtol=5e-2)

    print("KERNEL_OK")
</pallas_src>

<mosaic_0001>
module attributes {stable_mosaic.version = 11 : i64} {
  func.func @_mlp_kernel(%arg0: i32, %arg1: memref<8x896xbf16, #tpu.memory_space<vmem>>, %arg2: memref<896x128xbf16, #tpu.memory_space<vmem>>, %arg3: memref<1x128xf32, #tpu.memory_space<vmem>>, %arg4: memref<128x128xbf16, #tpu.memory_space<vmem>>, %arg5: memref<1x128xf32, #tpu.memory_space<vmem>>, %arg6: memref<128x128xbf16, #tpu.memory_space<vmem>>, %arg7: memref<1x128xf32, #tpu.memory_space<vmem>>, %arg8: memref<8x128xf32, #tpu.memory_space<vmem>>, %arg9: memref<8x128xf32, #tpu.memory_space<vmem>>, %arg10: memref<8x128xf32, #tpu.memory_space<vmem>>) attributes {dimension_semantics = [#tpu.dimension_semantics<parallel>], iteration_bounds = array<i64: 1>, scalar_prefetch = 0 : i64, scratch_operands = 0 : i64, tpu.core_type = #tpu.core_type<tc>, window_params = [{transform_indices = @transform_0, window_bounds = array<i64: 8, 896>}, {pipeline_mode = #tpu.pipeline_mode<synchronous>, transform_indices = @transform_1, window_bounds = array<i64: 896, 128>}, {pipeline_mode = #tpu.pipeline_mode<synchronous>, transform_indices = @transform_2, window_bounds = array<i64: 1, 128>}, {pipeline_mode = #tpu.pipeline_mode<synchronous>, transform_indices = @transform_3, window_bounds = array<i64: 128, 128>}, {pipeline_mode = #tpu.pipeline_mode<synchronous>, transform_indices = @transform_4, window_bounds = array<i64: 1, 128>}, {pipeline_mode = #tpu.pipeline_mode<synchronous>, transform_indices = @transform_5, window_bounds = array<i64: 128, 128>}, {pipeline_mode = #tpu.pipeline_mode<synchronous>, transform_indices = @transform_6, window_bounds = array<i64: 1, 128>}, {transform_indices = @transform_7, window_bounds = array<i64: 8, 128>}, {transform_indices = @transform_8, window_bounds = array<i64: 8, 128>}, {transform_indices = @transform_9, window_bounds = array<i64: 8, 128>}]} {
    %c0 = arith.constant 0 : index
    %c0_0 = arith.constant 0 : index
    %0 = vector.load %arg1[%c0, %c0_0] : memref<8x896xbf16, #tpu.memory_space<vmem>>, vector<8x896xbf16>
    %c0_1 = arith.constant 0 : index
    %c0_2 = arith.constant 0 : index
    %1 = vector.load %arg2[%c0_1, %c0_2] : memref<896x128xbf16, #tpu.memory_space<vmem>>, vector<896x128xbf16>
    %cst = arith.constant dense<0.000000e+00> : vector<8x128xf32>
    %2 = tpu.matmul %0, %1, %cst {dimension_numbers = #tpu.dot_dimension_numbers<[1], [0], [0], [1], [0, 0, 1, 1], [], []>} : vector<8x896xbf16>, vector<896x128xbf16>, vector<8x128xf32> -> vector<8x128xf32>
    %c0_3 = arith.constant 0 : index
    %c0_4 = arith.constant 0 : index
    %3 = vector.load %arg3[%c0_3, %c0_4] : memref<1x128xf32, #tpu.memory_space<vmem>>, vector<1x128xf32>
    %4 = vector.broadcast %3 : vector<1x128xf32> to vector<8x128xf32>
    %5 = arith.addf %2, %4 : vector<8x128xf32>
    %cst_5 = arith.constant 0.000000e+00 : f32
    %6 = vector.broadcast %cst_5 : f32 to vector<8x128xf32>
    %7 = arith.maximumf %5, %6 : vector<8x128xf32>
    %8 = arith.truncf %7 : vector<8x128xf32> to vector<8x128xbf16>
    %c0_6 = arith.constant 0 : index
    %c0_7 = arith.constant 0 : index
    %9 = vector.load %arg4[%c0_6, %c0_7] : memref<128x128xbf16, #tpu.memory_space<vmem>>, vector<128x128xbf16>
    %cst_8 = arith.constant dense<0.000000e+00> : vector<8x128xf32>
    %10 = tpu.matmul %8, %9, %cst_8 {dimension_numbers = #tpu.dot_dimension_numbers<[1], [0], [0], [1], [0, 0, 1, 1], [], []>} : vector<8x128xbf16>, vector<128x128xbf16>, vector<8x128xf32> -> vector<8x128xf32>
    %c0_9 = arith.constant 0 : index
    %c0_10 = arith.constant 0 : index
    %11 = vector.load %arg5[%c0_9, %c0_10] : memref<1x128xf32, #tpu.memory_space<vmem>>, vector<1x128xf32>
    %12 = vector.broadcast %11 : vector<1x128xf32> to vector<8x128xf32>
    %13 = arith.addf %10, %12 : vector<8x128xf32>
    %cst_11 = arith.constant 0.000000e+00 : f32
    %14 = vector.broadcast %cst_11 : f32 to vector<8x128xf32>
    %15 = arith.maximumf %13, %14 : vector<8x128xf32>
    %16 = arith.truncf %15 : vector<8x128xf32> to vector<8x128xbf16>
    %c0_12 = arith.constant 0 : index
    %c0_13 = arith.constant 0 : index
    %17 = vector.load %arg6[%c0_12, %c0_13] : memref<128x128xbf16, #tpu.memory_space<vmem>>, vector<128x128xbf16>
    %cst_14 = arith.constant dense<0.000000e+00> : vector<8x128xf32>
    %18 = tpu.matmul %16, %17, %cst_14 {dimension_numbers = #tpu.dot_dimension_numbers<[1], [0], [0], [1], [0, 0, 1, 1], [], []>} : vector<8x128xbf16>, vector<128x128xbf16>, vector<8x128xf32> -> vector<8x128xf32>
    %c0_15 = arith.constant 0 : index
    %c0_16 = arith.constant 0 : index
    %19 = vector.load %arg7[%c0_15, %c0_16] : memref<1x128xf32, #tpu.memory_space<vmem>>, vector<1x128xf32>
    %20 = vector.broadcast %19 : vector<1x128xf32> to vector<8x128xf32>
    %21 = arith.addf %18, %20 : vector<8x128xf32>
    %c0_17 = arith.constant 0 : index
    %c0_18 = arith.constant 0 : index
    %22 = vector.load %arg9[%c0_17, %c0_18] : memref<8x128xf32, #tpu.memory_space<vmem>>, vector<8x128xf32>
    tpu.vector_store %arg9[%c0_17, %c0_18], %7 {strides = array<i32>} : memref<8x128xf32, #tpu.memory_space<vmem>>, vector<8x128xf32>,
    %c0_19 = arith.constant 0 : index
    %c0_20 = arith.constant 0 : index
    %23 = vector.load %arg10[%c0_19, %c0_20] : memref<8x128xf32, #tpu.memory_space<vmem>>, vector<8x128xf32>
    tpu.vector_store %arg10[%c0_19, %c0_20], %15 {strides = array<i32>} : memref<8x128xf32, #tpu.memory_space<vmem>>, vector<8x128xf32>,
    %c0_21 = arith.constant 0 : index
    %c0_22 = arith.constant 0 : index
    %24 = vector.load %arg8[%c0_21, %c0_22] : memref<8x128xf32, #tpu.memory_space<vmem>>, vector<8x128xf32>
    tpu.vector_store %arg8[%c0_21, %c0_22], %21 {strides = array<i32>} : memref<8x128xf32, #tpu.memory_space<vmem>>, vector<8x128xf32>,
    return
  }
  func.func @transform_0(%arg0: i32) -> (i32, i32) {
    %c0_i32 = arith.constant 0 : i32
    %c0_i32_0 = arith.constant 0 : i32
    return %arg0, %c0_i32 : i32, i32
  }
  func.func @transform_1(%arg0: i32) -> (i32, i32) {
    %c0_i32 = arith.constant 0 : i32
    %c0_i32_0 = arith.constant 0 : i32
    %c0_i32_1 = arith.constant 0 : i32
    return %c0_i32, %c0_i32_0 : i32, i32
  }
  func.func @transform_2(%arg0: i32) -> (i32, i32) {
    %c0_i32 = arith.constant 0 : i32
    %c0_i32_0 = arith.constant 0 : i32
    %c0_i32_1 = arith.constant 0 : i32
    return %c0_i32, %c0_i32_0 : i32, i32
  }
  func.func @transform_3(%arg0: i32) -> (i32, i32) {
    %c0_i32 = arith.constant 0 : i32
    %c0_i32_0 = arith.constant 0 : i32
    %c0_i32_1 = arith.constant 0 : i32
    return %c0_i32, %c0_i32_0 : i32, i32
  }
  func.func @transform_4(%arg0: i32) -> (i32, i32) {
    %c0_i32 = arith.constant 0 : i32
    %c0_i32_0 = arith.constant 0 : i32
    %c0_i32_1 = arith.constant 0 : i32
    return %c0_i32, %c0_i32_0 : i32, i32
  }
  func.func @transform_5(%arg0: i32) -> (i32, i32) {
    %c0_i32 = arith.constant 0 : i32
    %c0_i32_0 = arith.constant 0 : i32
    %c0_i32_1 = arith.constant 0 : i32
    return %c0_i32, %c0_i32_0 : i32, i32
  }
  func.func @transform_6(%arg0: i32) -> (i32, i32) {
    %c0_i32 = arith.constant 0 : i32
    %c0_i32_0 = arith.constant 0 : i32
    %c0_i32_1 = arith.constant 0 : i32
    return %c0_i32, %c0_i32_0 : i32, i32
  }
  func.func @transform_7(%arg0: i32) -> (i32, i32) {
    %c0_i32 = arith.constant 0 : i32
    %c0_i32_0 = arith.constant 0 : i32
    return %arg0, %c0_i32 : i32, i32
  }
  func.func @transform_8(%arg0: i32) -> (i32, i32) {
    %c0_i32 = arith.constant 0 : i32
    %c0_i32_0 = arith.constant 0 : i32
    return %arg0, %c0_i32 : i32, i32
  }
  func.func @transform_9(%arg0: i32) -> (i32, i32) {
    %c0_i32 = arith.constant 0 : i32
    %c0_i32_0 = arith.constant 0 : i32
    return %arg0, %c0_i32 : i32, i32
  }
}

</mosaic_0001>

<llo_original>
// kernel: simple_nn_forward.1
$region0: #{simple_nn_forward.1}
  #allocation0 [shape = 'u32[]', space=smem, size = 0x4, offset = 0x4, fixed_abs, tag = 'smem constant byte address 0x4 - core index']
  #allocation1 [shape = 'u32[144,128]{1,0:T(1,128)}', space=vmem, size = 0x12000, scoped, tag = 'internal scratch']
  %s0 = inlined_call_operand.vmem [shape: bf16[8,896], index: 0, kind: input, shape index: {}]
  %s1 = inlined_call_operand.vmem [shape: bf16[896,128], index: 1, kind: input, shape index: {}]
  %s2 = inlined_call_operand.vmem [shape: f32[1,128], index: 2, kind: input, shape index: {}]
  %s3 = inlined_call_operand.vmem [shape: bf16[128,128], index: 3, kind: input, shape index: {}]
  %s4 = inlined_call_operand.vmem [shape: f32[1,128], index: 4, kind: input, shape index: {}]
  %s5 = inlined_call_operand.vmem [shape: bf16[128,128], index: 5, kind: input, shape index: {}]
  %s6 = inlined_call_operand.vmem [shape: f32[1,128], index: 6, kind: input, shape index: {}]
  %s7 = inlined_call_operand.hbm [shape: f32[8,128], index: 7, kind: output, shape index: {0}]
  %s8 = inlined_call_operand.hbm [shape: f32[8,128], index: 8, kind: output, shape index: {1}]
  %s9 = inlined_call_operand.hbm [shape: f32[8,128], index: 9, kind: output, shape index: {2}]
  %10 = xla_tuple %s7, %s8, %s9
  %s11 = sld [smem:[#allocation0]]
  $region54: #{simple_nn_forward.1} parent=0
    _
  %s13 = ssub.s32 1, %s11
  %s14 = scalar_select 0, %s13, %s11
  $region1: #{simple_nn_forward.1} parent=0
    #allocation2 [shape = 'u8[4096]{0}', space=vmem, size = 0x1000, scoped, tag = 'output window, operand 0, single buffered']
    #allocation3 [shape = 's32[1]{0}', space=sflag, size = 0x4, scoped, tag = 'scoped memory for simple_nn_forward.1']
    #allocation4 [shape = 'u8[4096]{0}', space=vmem, size = 0x1000, scoped, tag = 'output window, operand 1, single buffered']
    #allocation5 [shape = 's32[1]{0}', space=sflag, size = 0x4, scoped, tag = 'scoped memory for simple_nn_forward.1']
    #allocation6 [shape = 'u8[4096]{0}', space=vmem, size = 0x1000, scoped, tag = 'output window, operand 2, single buffered']
    %15 = vsyncpa [#allocation3], 0
    %16 = vsyncpa [#allocation5], 0
    // Predicated region
    $region2: #{simple_nn_forward.1} parent=1 // pred_check
      _
    $region3: #{simple_nn_forward.1} parent=1 // pred_check_branch
      %18 = sbr.rel (0) target = $region5
    $region4: #{simple_nn_forward.1} parent=1 // pred_region
      _
    $region5: #{simple_nn_forward.1} parent=1 // pred_fallthru
      _
    // Predicated region
    $region6: #{simple_nn_forward.1} parent=1 // pred_check
      _
    $region7: #{simple_nn_forward.1} parent=1 // pred_check_branch
      %20 = sbr.rel (0) target = $region9
    $region8: #{simple_nn_forward.1} parent=1 // pred_region
      _
    $region9: #{simple_nn_forward.1} parent=1 // pred_fallthru
      _
    // Predicated region
    $region10: #{simple_nn_forward.1} parent=1 // pred_check
      _
    $region11: #{simple_nn_forward.1} parent=1 // pred_check_branch
      %22 = sbr.rel (0) target = $region13
    $region12: #{simple_nn_forward.1} parent=1 // pred_region
      _
    $region13: #{simple_nn_forward.1} parent=1 // pred_fallthru
      _
    // Predicated region
    $region14: #{simple_nn_forward.1} parent=1 // pred_check
      _
    $region15: #{simple_nn_forward.1} parent=1 // pred_check_branch
      %24 = sbr.rel (0) target = $region17
    $region16: #{simple_nn_forward.1} parent=1 // pred_region
      _
    $region17: #{simple_nn_forward.1} parent=1 // pred_fallthru
      _
    // Predicated region
    $region18: #{simple_nn_forward.1} parent=1 // pred_check
      _
    $region19: #{simple_nn_forward.1} parent=1 // pred_check_branch
      %26 = sbr.rel (0) target = $region21
    $region20: #{simple_nn_forward.1} parent=1 // pred_region
      _
    $region21: #{simple_nn_forward.1} parent=1 // pred_fallthru
      _
    // Predicated region
    $region22: #{simple_nn_forward.1} parent=1 // pred_check
      _
    $region23: #{simple_nn_forward.1} parent=1 // pred_check_branch
      %28 = sbr.rel (0) target = $region25
    $region24: #{simple_nn_forward.1} parent=1 // pred_region
      _
    $region25: #{simple_nn_forward.1} parent=1 // pred_fallthru
      _
    // Predicated region
    $region26: #{simple_nn_forward.1} parent=1 // pred_check
      _
    $region27: #{simple_nn_forward.1} parent=1 // pred_check_branch
      %30 = sbr.rel (0) target = $region29
    $region28: #{simple_nn_forward.1} parent=1 // pred_region
      _
    $region29: #{simple_nn_forward.1} parent=1 // pred_fallthru
      _
    %v32 = vld [vmem:[%s0] sm:$0xff]
    %v33 = vld [vmem:[%s0 + $0x8] sm:$0xff]
    %v34 = vld [vmem:[%s0 + $0x10] sm:$0xff]
    %v35 = vld [vmem:[%s0 + $0x18] sm:$0xf]
    %v36 = vld [vmem:[%s1] sm:$0xf]
    %v37 = vld [vmem:[%s1 + $0x4] sm:$0xf]
    %v38 = vld [vmem:[%s1 + $0x8] sm:$0xf]
    %v39 = vld [vmem:[%s1 + $0xc] sm:$0xf]
    %v40 = vld [vmem:[%s1 + $0x10] sm:$0xf]
    %v41 = vld [vmem:[%s1 + $0x14] sm:$0xf]
    %v42 = vld [vmem:[%s1 + $0x18] sm:$0xf]
    %v43 = vld [vmem:[%s1 + $0x1c] sm:$0xf]
    %v44 = vld [vmem:[%s1 + $0x20] sm:$0xf]
    %v45 = vld [vmem:[%s1 + $0x24] sm:$0xf]
    %v46 = vld [vmem:[%s1 + $0x28] sm:$0xf]
    %v47 = vld [vmem:[%s1 + $0x2c] sm:$0xf]
    %v48 = vld [vmem:[%s1 + $0x30] sm:$0xf]
    %v49 = vld [vmem:[%s1 + $0x34] sm:$0xf]
    %v50 = vld [vmem:[%s1 + $0x38] sm:$0xf]
    %v51 = vld [vmem:[%s1 + $0x3c] sm:$0xf]
    %v52 = vld [vmem:[%s1 + $0x40] sm:$0xf]
    %v53 = vld [vmem:[%s1 + $0x44] sm:$0xf]
    %v54 = vld [vmem:[%s1 + $0x48] sm:$0xf]
    %v55 = vld [vmem:[%s1 + $0x4c] sm:$0xf]
    %v56 = vld [vmem:[%s1 + $0x50] sm:$0xf]
    %v57 = vld [vmem:[%s1 + $0x54] sm:$0xf]
    %v58 = vld [vmem:[%s1 + $0x58] sm:$0xf]
    %v59 = vld [vmem:[%s1 + $0x5c] sm:$0xf]
    %v60 = vld [vmem:[%s1 + $0x60] sm:$0xf]
    %v61 = vld [vmem:[%s1 + $0x64] sm:$0xf]
    %v62 = vld [vmem:[%s1 + $0x68] sm:$0xf]
    %v63 = vld [vmem:[%s1 + $0x6c] sm:$0xf]
    %v64 = vld [vmem:[%s1 + $0x70] sm:$0xf]
    %v65 = vld [vmem:[%s1 + $0x74] sm:$0xf]
    %v66 = vld [vmem:[%s1 + $0x78] sm:$0xf]
    %v67 = vld [vmem:[%s1 + $0x7c] sm:$0xf]
    %v68 = vld [vmem:[%s1 + $0x80] sm:$0xf]
    %v69 = vld [vmem:[%s1 + $0x84] sm:$0xf]
    %v70 = vld [vmem:[%s1 + $0x88] sm:$0xf]
    %v71 = vld [vmem:[%s1 + $0x8c] sm:$0xf]
    %v72 = vld [vmem:[%s1 + $0x90] sm:$0xf]
    %v73 = vld [vmem:[%s1 + $0x94] sm:$0xf]
    %v74 = vld [vmem:[%s1 + $0x98] sm:$0xf]
    %v75 = vld [vmem:[%s1 + $0x9c] sm:$0xf]
    %v76 = vld [vmem:[%s1 + $0xa0] sm:$0xf]
    %v77 = vld [vmem:[%s1 + $0xa4] sm:$0xf]
    %v78 = vld [vmem:[%s1 + $0xa8] sm:$0xf]
    %v79 = vld [vmem:[%s1 + $0xac] sm:$0xf]
    %v80 = vld [vmem:[%s1 + $0xb0] sm:$0xf]
    %v81 = vld [vmem:[%s1 + $0xb4] sm:$0xf]
    %v82 = vld [vmem:[%s1 + $0xb8] sm:$0xf]
    %v83 = vld [vmem:[%s1 + $0xbc] sm:$0xf]
    %v84 = vld [vmem:[%s1 + $0xc0] sm:$0xf]
    %v85 = vld [vmem:[%s1 + $0xc4] sm:$0xf]
    %v86 = vld [vmem:[%s1 + $0xc8] sm:$0xf]
    %v87 = vld [vmem:[%s1 + $0xcc] sm:$0xf]
    %v88 = vld [vmem:[%s1 + $0xd0] sm:$0xf]
    %v89 = vld [vmem:[%s1 + $0xd4] sm:$0xf]
    %v90 = vld [vmem:[%s1 + $0xd8] sm:$0xf]
    %v91 = vld [vmem:[%s1 + $0xdc] sm:$0xf]
    %v92 = vld [vmem:[%s1 + $0xe0] sm:$0xf]
    %v93 = vld [vmem:[%s1 + $0xe4] sm:$0xf]
    %v94 = vld [vmem:[%s1 + $0xe8] sm:$0xf]
    %v95 = vld [vmem:[%s1 + $0xec] sm:$0xf]
    %v96 = vld [vmem:[%s1 + $0xf0] sm:$0xf]
    %v97 = vld [vmem:[%s1 + $0xf4] sm:$0xf]
    %v98 = vld [vmem:[%s1 + $0xf8] sm:$0xf]
    %v99 = vld [vmem:[%s1 + $0xfc] sm:$0xf]
    %v100 = vld [vmem:[%s1 + $0x100] sm:$0xf]
    %v101 = vld [vmem:[%s1 + $0x104] sm:$0xf]
    %v102 = vld [vmem:[%s1 + $0x108] sm:$0xf]
    %v103 = vld [vmem:[%s1 + $0x10c] sm:$0xf]
    %v104 = vld [vmem:[%s1 + $0x110] sm:$0xf]
    %v105 = vld [vmem:[%s1 + $0x114] sm:$0xf]
    %v106 = vld [vmem:[%s1 + $0x118] sm:$0xf]
    %v107 = vld [vmem:[%s1 + $0x11c] sm:$0xf]
    %v108 = vld [vmem:[%s1 + $0x120] sm:$0xf]
    %v109 = vld [vmem:[%s1 + $0x124] sm:$0xf]
    %v110 = vld [vmem:[%s1 + $0x128] sm:$0xf]
    %v111 = vld [vmem:[%s1 + $0x12c] sm:$0xf]
    %v112 = vld [vmem:[%s1 + $0x130] sm:$0xf]
    %v113 = vld [vmem:[%s1 + $0x134] sm:$0xf]
    %v114 = vld [vmem:[%s1 + $0x138] sm:$0xf]
    %v115 = vld [vmem:[%s1 + $0x13c] sm:$0xf]
    %v116 = vld [vmem:[%s1 + $0x140] sm:$0xf]
    %v117 = vld [vmem:[%s1 + $0x144] sm:$0xf]
    %v118 = vld [vmem:[%s1 + $0x148] sm:$0xf]
    %v119 = vld [vmem:[%s1 + $0x14c] sm:$0xf]
    %v120 = vld [vmem:[%s1 + $0x150] sm:$0xf]
    %v121 = vld [vmem:[%s1 + $0x154] sm:$0xf]
    %v122 = vld [vmem:[%s1 + $0x158] sm:$0xf]
    %v123 = vld [vmem:[%s1 + $0x15c] sm:$0xf]
    %v124 = vld [vmem:[%s1 + $0x160] sm:$0xf]
    %v125 = vld [vmem:[%s1 + $0x164] sm:$0xf]
    %v126 = vld [vmem:[%s1 + $0x168] sm:$0xf]
    %v127 = vld [vmem:[%s1 + $0x16c] sm:$0xf]
    %v128 = vld [vmem:[%s1 + $0x170] sm:$0xf]
    %v129 = vld [vmem:[%s1 + $0x174] sm:$0xf]
    %v130 = vld [vmem:[%s1 + $0x178] sm:$0xf]
    %v131 = vld [vmem:[%s1 + $0x17c] sm:$0xf]
    %v132 = vld [vmem:[%s1 + $0x180] sm:$0xf]
    %v133 = vld [vmem:[%s1 + $0x184] sm:$0xf]
    %v134 = vld [vmem:[%s1 + $0x188] sm:$0xf]
    %v135 = vld [vmem:[%s1 + $0x18c] sm:$0xf]
    %v136 = vld [vmem:[%s1 + $0x190] sm:$0xf]
    %v137 = vld [vmem:[%s1 + $0x194] sm:$0xf]
    %v138 = vld [vmem:[%s1 + $0x198] sm:$0xf]
    %v139 = vld [vmem:[%s1 + $0x19c] sm:$0xf]
    %v140 = vld [vmem:[%s1 + $0x1a0] sm:$0xf]
    %v141 = vld [vmem:[%s1 + $0x1a4] sm:$0xf]
    %v142 = vld [vmem:[%s1 + $0x1a8] sm:$0xf]
    %v143 = vld [vmem:[%s1 + $0x1ac] sm:$0xf]
    %v144 = vld [vmem:[%s1 + $0x1b0] sm:$0xf]
    %v145 = vld [vmem:[%s1 + $0x1b4] sm:$0xf]
    %v146 = vld [vmem:[%s1 + $0x1b8] sm:$0xf]
    %v147 = vld [vmem:[%s1 + $0x1bc] sm:$0xf]
    %v148 = vld [vmem:[%s2] sm:$0x1]
    %v150 = vlaneseq
    %v151 = vshrl.u32 %v150, 7
    %v152 = vsub.s32 0, %v151
    %v153 = vrot.slane %v148, %v152
    %v159 = vunpack.c.l.b16 %v32
    %v160 = vunpack.c.h.b16 %v32
    %v161 = vunpack.c.l.b16 %v33
    %v162 = vunpack.c.h.b16 %v33
    %v163 = vunpack.c.l.b16 %v34
    %v164 = vunpack.c.h.b16 %v34
    %v165 = vunpack.c.l.b16 %v35
    %v166 = vpack.c.b16 %v159, %v159
    %v167 = vpack.c.b16 %v160, %v160
    %v168 = vpack.c.b16 %v161, %v161
    %v169 = vpack.c.b16 %v162, %v162
    %v170 = vpack.c.b16 %v163, %v163
    %v171 = vpack.c.b16 %v164, %v164
    %v172 = vpack.c.b16 %v165, %v165
    %v292 = vunpack.c.l.b16 %v36
    %v293 = vunpack.c.l.b16 %v37
    %v294 = vunpack.c.l.b16 %v38
    %v295 = vunpack.c.l.b16 %v39
    %v296 = vunpack.c.l.b16 %v40
    %v297 = vunpack.c.l.b16 %v41
    %v298 = vunpack.c.l.b16 %v42
    %v299 = vunpack.c.l.b16 %v43
    %v300 = vunpack.c.l.b16 %v44
    %v301 = vunpack.c.l.b16 %v45
    %v302 = vunpack.c.l.b16 %v46
    %v303 = vunpack.c.l.b16 %v47
    %v304 = vunpack.c.l.b16 %v48
    %v305 = vunpack.c.l.b16 %v49
    %v306 = vunpack.c.l.b16 %v50
    %v307 = vunpack.c.l.b16 %v51
    %v308 = vunpack.c.l.b16 %v52
    %v309 = vunpack.c.l.b16 %v53
    %v310 = vunpack.c.l.b16 %v54
    %v311 = vunpack.c.l.b16 %v55
    %v312 = vunpack.c.l.b16 %v56
    %v313 = vunpack.c.l.b16 %v57
    %v314 = vunpack.c.l.b16 %v58
    %v315 = vunpack.c.l.b16 %v59
    %v316 = vunpack.c.l.b16 %v60
    %v317 = vunpack.c.l.b16 %v61
    %v318 = vunpack.c.l.b16 %v62
    %v319 = vunpack.c.l.b16 %v63
    %v320 = vunpack.c.l.b16 %v64
    %v321 = vunpack.c.l.b16 %v65
    %v322 = vunpack.c.l.b16 %v66
    %v323 = vunpack.c.l.b16 %v67
    %v324 = vunpack.c.l.b16 %v68
    %v325 = vunpack.c.l.b16 %v69
    %v326 = vunpack.c.l.b16 %v70
    %v327 = vunpack.c.l.b16 %v71
    %v328 = vunpack.c.l.b16 %v72
    %v329 = vunpack.c.l.b16 %v73
    %v330 = vunpack.c.l.b16 %v74
    %v331 = vunpack.c.l.b16 %v75
    %v332 = vunpack.c.l.b16 %v76
    %v333 = vunpack.c.l.b16 %v77
    %v334 = vunpack.c.l.b16 %v78
    %v335 = vunpack.c.l.b16 %v79
    %v336 = vunpack.c.l.b16 %v80
    %v337 = vunpack.c.l.b16 %v81
    %v338 = vunpack.c.l.b16 %v82
    %v339 = vunpack.c.l.b16 %v83
    %v340 = vunpack.c.l.b16 %v84
    %v341 = vunpack.c.l.b16 %v85
    %v342 = vunpack.c.l.b16 %v86
    %v343 = vunpack.c.l.b16 %v87
    %v344 = vunpack.c.l.b16 %v88
    %v345 = vunpack.c.l.b16 %v89
    %v346 = vunpack.c.l.b16 %v90
    %v347 = vunpack.c.l.b16 %v91
    %v348 = vunpack.c.l.b16 %v92
    %v349 = vunpack.c.l.b16 %v93
    %v350 = vunpack.c.l.b16 %v94
    %v351 = vunpack.c.l.b16 %v95
    %v352 = vunpack.c.l.b16 %v96
    %v353 = vunpack.c.l.b16 %v97
    %v354 = vunpack.c.l.b16 %v98
    %v355 = vunpack.c.l.b16 %v99
    %v356 = vunpack.c.l.b16 %v100
    %v357 = vunpack.c.l.b16 %v101
    %v358 = vunpack.c.l.b16 %v102
    %v359 = vunpack.c.l.b16 %v103
    %v360 = vunpack.c.l.b16 %v104
    %v361 = vunpack.c.l.b16 %v105
    %v362 = vunpack.c.l.b16 %v106
    %v363 = vunpack.c.l.b16 %v107
    %v364 = vunpack.c.l.b16 %v108
    %v365 = vunpack.c.l.b16 %v109
    %v366 = vunpack.c.l.b16 %v110
    %v367 = vunpack.c.l.b16 %v111
    %v368 = vunpack.c.l.b16 %v112
    %v369 = vunpack.c.l.b16 %v113
    %v370 = vunpack.c.l.b16 %v114
    %v371 = vunpack.c.l.b16 %v115
    %v372 = vunpack.c.l.b16 %v116
    %v373 = vunpack.c.l.b16 %v117
    %v374 = vunpack.c.l.b16 %v118
    %v375 = vunpack.c.l.b16 %v119
    %v376 = vunpack.c.l.b16 %v120
    %v377 = vunpack.c.l.b16 %v121
    %v378 = vunpack.c.l.b16 %v122
    %v379 = vunpack.c.l.b16 %v123
    %v380 = vunpack.c.l.b16 %v124
    %v381 = vunpack.c.l.b16 %v125
    %v382 = vunpack.c.l.b16 %v126
    %v383 = vunpack.c.l.b16 %v127
    %v384 = vunpack.c.l.b16 %v128
    %v385 = vunpack.c.l.b16 %v129
    %v386 = vunpack.c.l.b16 %v130
    %v387 = vunpack.c.l.b16 %v131
    %v388 = vunpack.c.l.b16 %v132
    %v389 = vunpack.c.l.b16 %v133
    %v390 = vunpack.c.l.b16 %v134
    %v391 = vunpack.c.l.b16 %v135
    %v392 = vunpack.c.l.b16 %v136
    %v393 = vunpack.c.l.b16 %v137
    %v394 = vunpack.c.l.b16 %v138
    %v395 = vunpack.c.l.b16 %v139
    %v396 = vunpack.c.l.b16 %v140
    %v397 = vunpack.c.l.b16 %v141
    %v398 = vunpack.c.l.b16 %v142
    %v399 = vunpack.c.l.b16 %v143
    %v400 = vunpack.c.l.b16 %v144
    %v401 = vunpack.c.l.b16 %v145
    %v402 = vunpack.c.l.b16 %v146
    %v403 = vunpack.c.l.b16 %v147
    %v404 = vpack.c.b16 %v293, %v292
    %v405 = vpack.c.b16 %v295, %v294
    %v406 = vpack.c.b16 %v297, %v296
    %v407 = vpack.c.b16 %v299, %v298
    %v408 = vpack.c.b16 %v301, %v300
    %v409 = vpack.c.b16 %v303, %v302
    %v410 = vpack.c.b16 %v305, %v304
    %v411 = vpack.c.b16 %v307, %v306
    %v412 = vpack.c.b16 %v309, %v308
    %v413 = vpack.c.b16 %v311, %v310
    %v414 = vpack.c.b16 %v313, %v312
    %v415 = vpack.c.b16 %v315, %v314
    %v416 = vpack.c.b16 %v317, %v316
    %v417 = vpack.c.b16 %v319, %v318
    %v418 = vpack.c.b16 %v321, %v320
    %v419 = vpack.c.b16 %v323, %v322
    %v420 = vpack.c.b16 %v325, %v324
    %v421 = vpack.c.b16 %v327, %v326
    %v422 = vpack.c.b16 %v329, %v328
    %v423 = vpack.c.b16 %v331, %v330
    %v424 = vpack.c.b16 %v333, %v332
    %v425 = vpack.c.b16 %v335, %v334
    %v426 = vpack.c.b16 %v337, %v336
    %v427 = vpack.c.b16 %v339, %v338
    %v428 = vpack.c.b16 %v341, %v340
    %v429 = vpack.c.b16 %v343, %v342
    %v430 = vpack.c.b16 %v345, %v344
    %v431 = vpack.c.b16 %v347, %v346
    %v432 = vpack.c.b16 %v349, %v348
    %v433 = vpack.c.b16 %v351, %v350
    %v434 = vpack.c.b16 %v353, %v352
    %v435 = vpack.c.b16 %v355, %v354
    %v436 = vpack.c.b16 %v357, %v356
    %v437 = vpack.c.b16 %v359, %v358
    %v438 = vpack.c.b16 %v361, %v360
    %v439 = vpack.c.b16 %v363, %v362
    %v440 = vpack.c.b16 %v365, %v364
    %v441 = vpack.c.b16 %v367, %v366
    %v442 = vpack.c.b16 %v369, %v368
    %v443 = vpack.c.b16 %v371, %v370
    %v444 = vpack.c.b16 %v373, %v372
    %v445 = vpack.c.b16 %v375, %v374
    %v446 = vpack.c.b16 %v377, %v376
    %v447 = vpack.c.b16 %v379, %v378
    %v448 = vpack.c.b16 %v381, %v380
    %v449 = vpack.c.b16 %v383, %v382
    %v450 = vpack.c.b16 %v385, %v384
    %v451 = vpack.c.b16 %v387, %v386
    %v452 = vpack.c.b16 %v389, %v388
    %v453 = vpack.c.b16 %v391, %v390
    %v454 = vpack.c.b16 %v393, %v392
    %v455 = vpack.c.b16 %v395, %v394
    %v456 = vpack.c.b16 %v397, %v396
    %v457 = vpack.c.b16 %v399, %v398
    %v458 = vpack.c.b16 %v401, %v400
    %v459 = vpack.c.b16 %v403, %v402
    %516 = vmatprep.subr.bf16.mxu0 0
    %517 = vmatpush1.bf16.msra.mxu0 %v411
    %518 = vmatprep.subr.bf16.mxu0 0
    %519 = vmatpush1.bf16.msra.mxu0 %v410
    %520 = vmatprep.subr.bf16.mxu0 0
    %521 = vmatpush1.bf16.msra.mxu0 %v409
    %522 = vmatprep.subr.bf16.mxu0 0
    %523 = vmatpush1.bf16.msra.mxu0 %v408
    %524 = vmatprep.subr.bf16.mxu0 0
    %525 = vmatpush1.bf16.msra.mxu0 %v407
    %526 = vmatprep.subr.bf16.mxu0 0
    %527 = vmatpush1.bf16.msra.mxu0 %v406
    %528 = vmatprep.subr.bf16.mxu0 0
    %529 = vmatpush1.bf16.msra.mxu0 %v405
    %530 = vmatprep.subr.bf16.mxu0 0
    %531 = vmatpush1.bf16.msra.mxu0 %v404
    %532 = vmatprep.subr.bf16.mxu0 0
    %533 = vmatpush2.bf16.msra.mxu0 %v419
    %534 = vmatprep.subr.bf16.mxu0 0
    %535 = vmatpush2.bf16.msra.mxu0 %v418
    %536 = vmatprep.subr.bf16.mxu0 0
    %537 = vmatpush2.bf16.msra.mxu0 %v417
    %538 = vmatprep.subr.bf16.mxu0 0
    %539 = vmatpush2.bf16.msra.mxu0 %v416
    %540 = vmatprep.subr.bf16.mxu0 0
    %541 = vmatpush2.bf16.msra.mxu0 %v415
    %542 = vmatprep.subr.bf16.mxu0 0
    %543 = vmatpush2.bf16.msra.mxu0 %v414
    %544 = vmatprep.subr.bf16.mxu0 0
    %545 = vmatpush2.bf16.msra.mxu0 %v413
    %546 = vmatprep.subr.bf16.mxu0 0
    %547 = vmatpush2.bf16.msra.mxu0 %v412
    %548 = vmatprep.mubr.bf16.mxu0 %v167
    %549 = vmatmul.mubr.bf16.gmra.mxu0 %v166
    %v550 = vpop.f32.mrf.mxu0
    %v551 = vadd.f32 %v153, %v550
    %v552 = vpop.f32.mrf.mxu0
    %v553 = vpop.f32.mrf.mxu0
    %v554 = vpop.f32.mrf.mxu0
    %555 = vdwg.mxu0
    %556 = vmatprep.subr.bf16.mxu0 0
    %557 = vmatpush1.bf16.msra.mxu0 %v427
    %558 = vmatprep.subr.bf16.mxu0 0
    %559 = vmatpush1.bf16.msra.mxu0 %v426
    %560 = vmatprep.subr.bf16.mxu0 0
    %561 = vmatpush1.bf16.msra.mxu0 %v425
    %562 = vmatprep.subr.bf16.mxu0 0
    %563 = vmatpush1.bf16.msra.mxu0 %v424
    %564 = vmatprep.subr.bf16.mxu0 0
    %565 = vmatpush1.bf16.msra.mxu0 %v423
    %566 = vmatprep.subr.bf16.mxu0 0
    %567 = vmatpush1.bf16.msra.mxu0 %v422
    %568 = vmatprep.subr.bf16.mxu0 0
    %569 = vmatpush1.bf16.msra.mxu0 %v421
    %570 = vmatprep.subr.bf16.mxu0 0
    %571 = vmatpush1.bf16.msra.mxu0 %v420
    %572 = vmatprep.subr.bf16.mxu0 0
    %573 = vmatpush2.bf16.msra.mxu0 %v435
    %574 = vmatprep.subr.bf16.mxu0 0
    %575 = vmatpush2.bf16.msra.mxu0 %v434
    %576 = vmatprep.subr.bf16.mxu0 0
    %577 = vmatpush2.bf16.msra.mxu0 %v433
    %578 = vmatprep.subr.bf16.mxu0 0
    %579 = vmatpush2.bf16.msra.mxu0 %v432
    %580 = vmatprep.subr.bf16.mxu0 0
    %581 = vmatpush2.bf16.msra.mxu0 %v431
    %582 = vmatprep.subr.bf16.mxu0 0
    %583 = vmatpush2.bf16.msra.mxu0 %v430
    %584 = vmatprep.subr.bf16.mxu0 0
    %585 = vmatpush2.bf16.msra.mxu0 %v429
    %586 = vmatprep.subr.bf16.mxu0 0
    %587 = vmatpush2.bf16.msra.mxu0 %v428
    %588 = vmatprep.mubr.bf16.mxu0 %v169
    %589 = vmatmul.mubr.bf16.gmra.mxu0 %v168
    %v590 = vpop.f32.mrf.mxu0
    %v591 = vadd.f32 %v551, %v590
    %v592 = vpop.f32.mrf.mxu0
    %v593 = vpop.f32.mrf.mxu0
    %v594 = vpop.f32.mrf.mxu0
    %595 = vdwg.mxu0
    %596 = vmatprep.subr.bf16.mxu0 0
    %597 = vmatpush1.bf16.msra.mxu0 %v443
    %598 = vmatprep.subr.bf16.mxu0 0
    %599 = vmatpush1.bf16.msra.mxu0 %v442
    %600 = vmatprep.subr.bf16.mxu0 0
    %601 = vmatpush1.bf16.msra.mxu0 %v441
    %602 = vmatprep.subr.bf16.mxu0 0
    %603 = vmatpush1.bf16.msra.mxu0 %v440
    %604 = vmatprep.subr.bf16.mxu0 0
    %605 = vmatpush1.bf16.msra.mxu0 %v439
    %606 = vmatprep.subr.bf16.mxu0 0
    %607 = vmatpush1.bf16.msra.mxu0 %v438
    %608 = vmatprep.subr.bf16.mxu0 0
    %609 = vmatpush1.bf16.msra.mxu0 %v437
    %610 = vmatprep.subr.bf16.mxu0 0
    %611 = vmatpush1.bf16.msra.mxu0 %v436
    %612 = vmatprep.subr.bf16.mxu0 0
    %613 = vmatpush2.bf16.msra.mxu0 %v451
    %614 = vmatprep.subr.bf16.mxu0 0
    %615 = vmatpush2.bf16.msra.mxu0 %v450
    %616 = vmatprep.subr.bf16.mxu0 0
    %617 = vmatpush2.bf16.msra.mxu0 %v449
    %618 = vmatprep.subr.bf16.mxu0 0
    %619 = vmatpush2.bf16.msra.mxu0 %v448
    %620 = vmatprep.subr.bf16.mxu0 0
    %621 = vmatpush2.bf16.msra.mxu0 %v447
    %622 = vmatprep.subr.bf16.mxu0 0
    %623 = vmatpush2.bf16.msra.mxu0 %v446
    %624 = vmatprep.subr.bf16.mxu0 0
    %625 = vmatpush2.bf16.msra.mxu0 %v445
    %626 = vmatprep.subr.bf16.mxu0 0
    %627 = vmatpush2.bf16.msra.mxu0 %v444
    %628 = vmatprep.mubr.bf16.mxu0 %v171
    %629 = vmatmul.mubr.bf16.gmra.mxu0 %v170
    %v630 = vpop.f32.mrf.mxu0
    %v631 = vadd.f32 %v591, %v630
    %v632 = vpop.f32.mrf.mxu0
    %v633 = vpop.f32.mrf.mxu0
    %v634 = vpop.f32.mrf.mxu0
    %635 = vdwg.mxu0
    %636 = vmatprep.subr.bf16.mxu0 0
    %637 = vmatpush1.bf16.msra.mxu0 %v459
    %638 = vmatprep.subr.bf16.mxu0 0
    %639 = vmatpush1.bf16.msra.mxu0 %v458
    %640 = vmatprep.subr.bf16.mxu0 0
    %641 = vmatpush1.bf16.msra.mxu0 %v457
    %642 = vmatprep.subr.bf16.mxu0 0
    %643 = vmatpush1.bf16.msra.mxu0 %v456
    %644 = vmatprep.subr.bf16.mxu0 0
    %645 = vmatpush1.bf16.msra.mxu0 %v455
    %646 = vmatprep.subr.bf16.mxu0 0
    %647 = vmatpush1.bf16.msra.mxu0 %v454
    %648 = vmatprep.subr.bf16.mxu0 0
    %649 = vmatpush1.bf16.msra.mxu0 %v453
    %650 = vmatprep.subr.bf16.mxu0 0
    %651 = vmatpush1.bf16.msra.mxu0 %v452
    %652 = vmatprep.subr.bf16.mxu0 0
    %653 = vmatpush2.bf16.msra.mxu0 0
    %654 = vmatprep.subr.bf16.mxu0 0
    %655 = vmatpush2.bf16.msra.mxu0 0
    %656 = vmatprep.subr.bf16.mxu0 0
    %657 = vmatpush2.bf16.msra.mxu0 0
    %658 = vmatprep.subr.bf16.mxu0 0
    %659 = vmatpush2.bf16.msra.mxu0 0
    %660 = vmatprep.subr.bf16.mxu0 0
    %661 = vmatpush2.bf16.msra.mxu0 0
    %662 = vmatprep.subr.bf16.mxu0 0
    %663 = vmatpush2.bf16.msra.mxu0 0
    %664 = vmatprep.subr.bf16.mxu0 0
    %665 = vmatpush2.bf16.msra.mxu0 0
    %666 = vmatprep.subr.bf16.mxu0 0
    %667 = vmatpush2.bf16.msra.mxu0 0
    %668 = vmatprep.mubr.bf16.mxu0 0
    %669 = vmatmul.mubr.bf16.gmra.mxu0 %v172
    %v670 = vpop.f32.mrf.mxu0
    %v671 = vadd.f32 %v631, %v670
    %v672 = vpop.f32.mrf.mxu0
    %v673 = vpop.f32.mrf.mxu0
    %v674 = vpop.f32.mrf.mxu0
    %675 = vdwg.mxu0
    %v676 = vmax.f32 %v671, 0.0
    %v677 = vpack.c.bf16 %v676, %v676
    %v678 = vld [vmem:[%s3] sm:$0xf]
    %v679 = vld [vmem:[%s3 + $0x4] sm:$0xf]
    %v680 = vld [vmem:[%s3 + $0x8] sm:$0xf]
    %v681 = vld [vmem:[%s3 + $0xc] sm:$0xf]
    %v682 = vld [vmem:[%s3 + $0x10] sm:$0xf]
    %v683 = vld [vmem:[%s3 + $0x14] sm:$0xf]
    %v684 = vld [vmem:[%s3 + $0x18] sm:$0xf]
    %v685 = vld [vmem:[%s3 + $0x1c] sm:$0xf]
    %v686 = vld [vmem:[%s3 + $0x20] sm:$0xf]
    %v687 = vld [vmem:[%s3 + $0x24] sm:$0xf]
    %v688 = vld [vmem:[%s3 + $0x28] sm:$0xf]
    %v689 = vld [vmem:[%s3 + $0x2c] sm:$0xf]
    %v690 = vld [vmem:[%s3 + $0x30] sm:$0xf]
    %v691 = vld [vmem:[%s3 + $0x34] sm:$0xf]
    %v692 = vld [vmem:[%s3 + $0x38] sm:$0xf]
    %v693 = vld [vmem:[%s3 + $0x3c] sm:$0xf]
    %v694 = vld [vmem:[%s4] sm:$0x1]
    %v696 = vlaneseq
    %v697 = vshrl.u32 %v696, 7
    %v698 = vsub.s32 0, %v697
    %v699 = vrot.slane %v694, %v698
    %v717 = vunpack.c.l.b16 %v678
    %v718 = vunpack.c.l.b16 %v679
    %v719 = vunpack.c.l.b16 %v680
    %v720 = vunpack.c.l.b16 %v681
    %v721 = vunpack.c.l.b16 %v682
    %v722 = vunpack.c.l.b16 %v683
    %v723 = vunpack.c.l.b16 %v684
    %v724 = vunpack.c.l.b16 %v685
    %v725 = vunpack.c.l.b16 %v686
    %v726 = vunpack.c.l.b16 %v687
    %v727 = vunpack.c.l.b16 %v688
    %v728 = vunpack.c.l.b16 %v689
    %v729 = vunpack.c.l.b16 %v690
    %v730 = vunpack.c.l.b16 %v691
    %v731 = vunpack.c.l.b16 %v692
    %v732 = vunpack.c.l.b16 %v693
    %v733 = vpack.c.b16 %v718, %v717
    %v734 = vpack.c.b16 %v720, %v719
    %v735 = vpack.c.b16 %v722, %v721
    %v736 = vpack.c.b16 %v724, %v723
    %v737 = vpack.c.b16 %v726, %v725
    %v738 = vpack.c.b16 %v728, %v727
    %v739 = vpack.c.b16 %v730, %v729
    %v740 = vpack.c.b16 %v732, %v731
    %749 = vmatprep.subr.bf16.mxu0 0
    %750 = vmatpush1.bf16.msra.mxu0 %v740
    %751 = vmatprep.subr.bf16.mxu0 0
    %752 = vmatpush1.bf16.msra.mxu0 %v739
    %753 = vmatprep.subr.bf16.mxu0 0
    %754 = vmatpush1.bf16.msra.mxu0 %v738
    %755 = vmatprep.subr.bf16.mxu0 0
    %756 = vmatpush1.bf16.msra.mxu0 %v737
    %757 = vmatprep.subr.bf16.mxu0 0
    %758 = vmatpush1.bf16.msra.mxu0 %v736
    %759 = vmatprep.subr.bf16.mxu0 0
    %760 = vmatpush1.bf16.msra.mxu0 %v735
    %761 = vmatprep.subr.bf16.mxu0 0
    %762 = vmatpush1.bf16.msra.mxu0 %v734
    %763 = vmatprep.subr.bf16.mxu0 0
    %764 = vmatpush1.bf16.msra.mxu0 %v733
    %765 = vmatprep.subr.bf16.mxu0 0
    %766 = vmatpush2.bf16.msra.mxu0 0
    %767 = vmatprep.subr.bf16.mxu0 0
    %768 = vmatpush2.bf16.msra.mxu0 0
    %769 = vmatprep.subr.bf16.mxu0 0
    %770 = vmatpush2.bf16.msra.mxu0 0
    %771 = vmatprep.subr.bf16.mxu0 0
    %772 = vmatpush2.bf16.msra.mxu0 0
    %773 = vmatprep.subr.bf16.mxu0 0
    %774 = vmatpush2.bf16.msra.mxu0 0
    %775 = vmatprep.subr.bf16.mxu0 0
    %776 = vmatpush2.bf16.msra.mxu0 0
    %777 = vmatprep.subr.bf16.mxu0 0
    %778 = vmatpush2.bf16.msra.mxu0 0
    %779 = vmatprep.subr.bf16.mxu0 0
    %780 = vmatpush2.bf16.msra.mxu0 0
    %781 = vmatprep.mubr.bf16.mxu0 0
    %782 = vmatmul.mubr.bf16.gmra.mxu0 %v677
    %v783 = vpop.f32.mrf.mxu0
    %v784 = vadd.f32 %v699, %v783
    %v785 = vpop.f32.mrf.mxu0
    %v786 = vpop.f32.mrf.mxu0
    %v787 = vpop.f32.mrf.mxu0
    %788 = vdwg.mxu0
    %v789 = vmax.f32 %v784, 0.0
    %v790 = vpack.c.bf16 %v789, %v789
    %v791 = vld [vmem:[%s5] sm:$0xf]
    %v792 = vld [vmem:[%s5 + $0x4] sm:$0xf]
    %v793 = vld [vmem:[%s5 + $0x8] sm:$0xf]
    %v794 = vld [vmem:[%s5 + $0xc] sm:$0xf]
    %v795 = vld [vmem:[%s5 + $0x10] sm:$0xf]
    %v796 = vld [vmem:[%s5 + $0x14] sm:$0xf]
    %v797 = vld [vmem:[%s5 + $0x18] sm:$0xf]
    %v798 = vld [vmem:[%s5 + $0x1c] sm:$0xf]
    %v799 = vld [vmem:[%s5 + $0x20] sm:$0xf]
    %v800 = vld [vmem:[%s5 + $0x24] sm:$0xf]
    %v801 = vld [vmem:[%s5 + $0x28] sm:$0xf]
    %v802 = vld [vmem:[%s5 + $0x2c] sm:$0xf]
    %v803 = vld [vmem:[%s5 + $0x30] sm:$0xf]
    %v804 = vld [vmem:[%s5 + $0x34] sm:$0xf]
    %v805 = vld [vmem:[%s5 + $0x38] sm:$0xf]
    %v806 = vld [vmem:[%s5 + $0x3c] sm:$0xf]
    %v807 = vld [vmem:[%s6] sm:$0x1]
    %v809 = vlaneseq
    %v810 = vshrl.u32 %v809, 7
    %v811 = vsub.s32 0, %v810
    %v812 = vrot.slane %v807, %v811
    %v830 = vunpack.c.l.b16 %v791
    %v831 = vunpack.c.l.b16 %v792
    %v832 = vunpack.c.l.b16 %v793
    %v833 = vunpack.c.l.b16 %v794
    %v834 = vunpack.c.l.b16 %v795
    %v835 = vunpack.c.l.b16 %v796
    %v836 = vunpack.c.l.b16 %v797
    %v837 = vunpack.c.l.b16 %v798
    %v838 = vunpack.c.l.b16 %v799
    %v839 = vunpack.c.l.b16 %v800
    %v840 = vunpack.c.l.b16 %v801
    %v841 = vunpack.c.l.b16 %v802
    %v842 = vunpack.c.l.b16 %v803
    %v843 = vunpack.c.l.b16 %v804
    %v844 = vunpack.c.l.b16 %v805
    %v845 = vunpack.c.l.b16 %v806
    %v846 = vpack.c.b16 %v831, %v830
    %v847 = vpack.c.b16 %v833, %v832
    %v848 = vpack.c.b16 %v835, %v834
    %v849 = vpack.c.b16 %v837, %v836
    %v850 = vpack.c.b16 %v839, %v838
    %v851 = vpack.c.b16 %v841, %v840
    %v852 = vpack.c.b16 %v843, %v842
    %v853 = vpack.c.b16 %v845, %v844
    %862 = vmatprep.subr.bf16.mxu0 0
    %863 = vmatpush1.bf16.msra.mxu0 %v853
    %864 = vmatprep.subr.bf16.mxu0 0
    %865 = vmatpush1.bf16.msra.mxu0 %v852
    %866 = vmatprep.subr.bf16.mxu0 0
    %867 = vmatpush1.bf16.msra.mxu0 %v851
    %868 = vmatprep.subr.bf16.mxu0 0
    %869 = vmatpush1.bf16.msra.mxu0 %v850
    %870 = vmatprep.subr.bf16.mxu0 0
    %871 = vmatpush1.bf16.msra.mxu0 %v849
    %872 = vmatprep.subr.bf16.mxu0 0
    %873 = vmatpush1.bf16.msra.mxu0 %v848
    %874 = vmatprep.subr.bf16.mxu0 0
    %875 = vmatpush1.bf16.msra.mxu0 %v847
    %876 = vmatprep.subr.bf16.mxu0 0
    %877 = vmatpush1.bf16.msra.mxu0 %v846
    %878 = vmatprep.subr.bf16.mxu0 0
    %879 = vmatpush2.bf16.msra.mxu0 0
    %880 = vmatprep.subr.bf16.mxu0 0
    %881 = vmatpush2.bf16.msra.mxu0 0
    %882 = vmatprep.subr.bf16.mxu0 0
    %883 = vmatpush2.bf16.msra.mxu0 0
    %884 = vmatprep.subr.bf16.mxu0 0
    %885 = vmatpush2.bf16.msra.mxu0 0
    %886 = vmatprep.subr.bf16.mxu0 0
    %887 = vmatpush2.bf16.msra.mxu0 0
    %888 = vmatprep.subr.bf16.mxu0 0
    %889 = vmatpush2.bf16.msra.mxu0 0
    %890 = vmatprep.subr.bf16.mxu0 0
    %891 = vmatpush2.bf16.msra.mxu0 0
    %892 = vmatprep.subr.bf16.mxu0 0
    %893 = vmatpush2.bf16.msra.mxu0 0
    %894 = vmatprep.mubr.bf16.mxu0 0
    %895 = vmatmul.mubr.bf16.gmra.mxu0 %v790
    %v896 = vpop.f32.mrf.mxu0
    %v897 = vadd.f32 %v812, %v896
    %v898 = vpop.f32.mrf.mxu0
    %v899 = vpop.f32.mrf.mxu0
    %v900 = vpop.f32.mrf.mxu0
    %901 = vdwg.mxu0
    %902 = vst [vmem:[#allocation4] sm:$0xff] %v676
    %903 = vst [vmem:[#allocation6] sm:$0xff] %v789
    %904 = vst [vmem:[#allocation2] sm:$0xff] %v897
    // Predicated region
    $region30: #{simple_nn_forward.1} parent=1 // pred_check
      _
    $region31: #{simple_nn_forward.1} parent=1 // pred_check_branch
      %906 = sbr.rel (0) target = $region33
    $region32: #{simple_nn_forward.1} parent=1 // pred_region
      %s908 = ssub.s32 128, 128
      %909 = vsyncadd [#allocation3], %s908
      %s911 = sshll.u32 [#allocation2], 4
      %s912 = int_to_ptr.vmem [resolvable:$true] %s911
      %914 = dma.vmem_to_hbm [thread:$0]  %s912, 128, %s7, [#allocation3]
    $region33: #{simple_nn_forward.1} parent=1 // pred_fallthru
      _
    // Predicated region
    $region34: #{simple_nn_forward.1} parent=1 // pred_check
      _
    $region35: #{simple_nn_forward.1} parent=1 // pred_check_branch
      %916 = sbr.rel (0) target = $region37
    $region36: #{simple_nn_forward.1} parent=1 // pred_region
      %s918 = ssub.s32 128, 128
      %919 = vsyncadd [#allocation5], %s918
      %s921 = sshll.u32 [#allocation4], 4
      %s922 = int_to_ptr.vmem [resolvable:$true] %s921
      %924 = dma.vmem_to_hbm [thread:$0]  %s922, 128, %s8, [#allocation5]
    $region37: #{simple_nn_forward.1} parent=1 // pred_fallthru
      _
    // Predicated region
    $region38: #{simple_nn_forward.1} parent=1 // pred_check
      _
    $region39: #{simple_nn_forward.1} parent=1 // pred_check_branch
      %926 = sbr.rel (0) target = $region41
    $region40: #{simple_nn_forward.1} parent=1 // pred_region
      %s928 = ssub.s32 128, 128
      %929 = vsyncadd [#allocation5], %s928
      %s931 = sshll.u32 [#allocation6], 4
      %s932 = int_to_ptr.vmem [resolvable:$true] %s931
      %934 = dma.vmem_to_hbm [thread:$0]  %s932, 128, %s9, [#allocation5]
    $region41: #{simple_nn_forward.1} parent=1 // pred_fallthru
      _
    // Predicated region
    $region42: #{simple_nn_forward.1} parent=1 // pred_check
      _
    $region43: #{simple_nn_forward.1} parent=1 // pred_check_branch
      %936 = sbr.rel (0) target = $region45
    $region44: #{simple_nn_forward.1} parent=1 // pred_region
      %937 = dma.done [#allocation3], 128
    $region45: #{simple_nn_forward.1} parent=1 // pred_fallthru
      _
    // Predicated region
    $region46: #{simple_nn_forward.1} parent=1 // pred_check
      _
    $region47: #{simple_nn_forward.1} parent=1 // pred_check_branch
      %939 = sbr.rel (0) target = $region49
    $region48: #{simple_nn_forward.1} parent=1 // pred_region
      %940 = dma.done [#allocation5], 128
    $region49: #{simple_nn_forward.1} parent=1 // pred_fallthru
      _
    // Predicated region
    $region50: #{simple_nn_forward.1} parent=1 // pred_check
      _
    $region51: #{simple_nn_forward.1} parent=1 // pred_check_branch
      %942 = sbr.rel (0) target = $region53
    $region52: #{simple_nn_forward.1} parent=1 // pred_region
      %943 = dma.done [#allocation5], 128
    $region53: #{simple_nn_forward.1} parent=1 // pred_fallthru
      _
    %944 = vsyncpa [#allocation3], 1
    %945 = vsyncpa [#allocation5], 1

</llo_original>
